<compile_context>
chip_gen: v6e
topology: v6e:2x2x1
jax: 0.10.0
libtpu: 0.0.40
codegen_flags: <defaults>
</compile_context>

<pallas_src>
import functools

import jax
import jax.numpy as jnp
from jax import lax
from jax.experimental import pallas as pl
from jax.experimental.pallas import tpu as pltpu


LANE = 128          # lane-dense padded class width for the output store
MAX_ROW_TILE = 256  # adj^T row-tile size once N exceeds it


def _round_up(n, m):
    return ((n + m - 1) // m) * m


# ---------------------------------------------------------------------------
# Fused Pallas kernel (per row tile):
#   fused input projections + folded T-step propagation + logits/log_softmax
# ---------------------------------------------------------------------------

def _n2node_kernel(x_ref, adjT_ref, w_cat_ref, b_cat_ref,
                   class_w_ref, class_mask_ref, o_ref, *, q_dim):
    # node_state_interface + feat_ff fused into ONE matmul (Dropout = identity)
    h = jnp.dot(x_ref[...], w_cat_ref[...], preferred_element_type=jnp.float32)
    h = h + b_cat_ref[...]
    h = jnp.where(h > 0, h, 0.01 * h)                 # LeakyReLU(0.01)

    # TODO(synk): NodePseudoSubsystem is undefined in the reference; surrogate
    # = T normalized-adjacency propagations.  Those are linear, so adj^T is
    # precomputed and only the node_state slice (which feeds the logits) is
    # propagated; the feat_ff half of h is unused under this surrogate.
    ns = h[:, :q_dim]                                 # (N_pad, q_dim)
    ns_p = jnp.dot(adjT_ref[...], ns.astype(jnp.bfloat16),
                   preferred_element_type=jnp.float32)   # (tm, q_dim)

    # TODO(synk): PathIntegral is undefined in the reference; surrogate =
    # projection by mean(class_neuron, axis=0).T fused with log_softmax
    # (get_output, 'single-class').  class_w is lane-padded to 128; the
    # additive mask kills the padded classes.
    z = jnp.dot(ns_p, class_w_ref[...], preferred_element_type=jnp.float32)
    z = z + class_mask_ref[...]                       # (tm, LANE)
    m = jnp.max(z, axis=-1, keepdims=True)
    lse = m + jnp.log(jnp.sum(jnp.exp(z - m), axis=-1, keepdims=True))
    o_ref[...] = z - lse                              # lane-dense, unmasked vst


def n2node_forward(x, adjT_bf16, w_cat, b_cat, class_w_pad, class_mask,
                   *, nclass):
    N, d_in = x.shape
    n_pad = adjT_bf16.shape[0]
    q_dim = class_w_pad.shape[0]
    d_cat = w_cat.shape[1]

    if n_pad != N:
        x = jnp.pad(x, ((0, n_pad - N), (0, 0)))

    tm = n_pad if n_pad <= MAX_ROW_TILE else MAX_ROW_TILE
    grid = (n_pad // tm,)

    kern = functools.partial(_n2node_kernel, q_dim=q_dim)
    out_pad = pl.pallas_call(
        kern,
        out_shape=jax.ShapeDtypeStruct((n_pad, LANE), jnp.float32),
        grid_spec=pltpu.PrefetchScalarGridSpec(
            num_scalar_prefetch=0,
            grid=grid,
            in_specs=[
                pl.BlockSpec((n_pad, d_in), lambda i: (0, 0)),   # x (resident)
                pl.BlockSpec((tm, n_pad), lambda i: (i, 0)),     # adj^T row tile
                pl.BlockSpec((d_in, d_cat), lambda i: (0, 0)),   # W_cat
                pl.BlockSpec((1, d_cat), lambda i: (0, 0)),      # b_cat
                pl.BlockSpec((q_dim, LANE), lambda i: (0, 0)),   # class_w (padded)
                pl.BlockSpec((1, LANE), lambda i: (0, 0)),       # class mask
            ],
            out_specs=pl.BlockSpec((tm, LANE), lambda i: (i, 0)),
        ),
        compiler_params=pltpu.CompilerParams(
            dimension_semantics=("parallel",)),
    )(x, adjT_bf16, w_cat, b_cat, class_w_pad, class_mask)

    return out_pad[:N, :nclass]


# ---------------------------------------------------------------------------
# One-time (per graph / per params) preprocessing — outside the hot path.
# ---------------------------------------------------------------------------

def normalized_adjacency_dense(edge_index, num_nodes):
    """Dense D^-1/2 A D^-1/2 with add_remaining_self_loops semantics
    (self-loops added only for nodes that do not already have one).
    Degree is taken over the row index (source), matching the reference's
    scatter(edge_weight, row, ...)."""
    row, col = edge_index[0], edge_index[1]
    ew = jnp.ones((row.shape[0],), jnp.float32)

    has_self = jnp.zeros((num_nodes,), jnp.float32).at[row].add(
        jnp.where(row == col, 1.0, 0.0))
    diag_extra = jnp.where(has_self > 0, 0.0, 1.0)    # weight of ADDED self-loop

    deg = jnp.zeros((num_nodes,), jnp.float32).at[row].add(ew) + diag_extra
    dis = jnp.where(deg > 0, lax.rsqrt(deg), 0.0)

    w_e = dis[row] * ew * dis[col]
    w_d = dis * diag_extra * dis

    nodes = jnp.arange(num_nodes)
    adj = jnp.zeros((num_nodes, num_nodes), jnp.float32)
    adj = adj.at[row, col].add(w_e)
    adj = adj.at[nodes, nodes].add(w_d)
    return adj


def prepare_inference(params, edge_index, num_nodes, nclass, T):
    """Precompute graph- and parameter-only quantities once:
    adj^T (bf16, row-padded), fused W_cat/b_cat, padded class_w, class mask."""
    adj = normalized_adjacency_dense(edge_index, num_nodes)          # (N, N) f32

    # T propagation steps are linear under the surrogate → fold into adj^T.
    adjT = jnp.eye(num_nodes, dtype=jnp.float32)
    for _ in range(T):
        adjT = adjT @ adj

    # Pad node dim to a multiple of 8 (or of the row tile once N > tile).
    if num_nodes <= MAX_ROW_TILE:
        n_pad = _round_up(num_nodes, 8)
    else:
        n_pad = _round_up(num_nodes, MAX_ROW_TILE)
    pad = n_pad - num_nodes
    adjT = jnp.pad(adjT, ((0, pad), (0, pad))).astype(jnp.bfloat16)  # bf16 MXU path

    # Fused input projections.
    w_cat = jnp.concatenate([params["w_nsi"], params["w_ff"]], axis=1)
    b_cat = jnp.concatenate([params["b_nsi"], params["b_ff"]], axis=1)

    # Surrogate PathIntegral weight, lane-padded, plus additive class mask.
    class_w = jnp.mean(params["class_neuron"], axis=0).T             # (q_dim, nclass)
    q_dim = class_w.shape[0]
    class_w_pad = jnp.zeros((q_dim, LANE), jnp.float32).at[:, :nclass].set(class_w)
    class_mask = jnp.where(jnp.arange(LANE) < nclass, 0.0, -1e30
                           ).astype(jnp.float32)[None, :]
    return adjT, w_cat, b_cat, class_w_pad, class_mask


# ---------------------------------------------------------------------------
# Main
# ---------------------------------------------------------------------------

if __name__ == "__main__":
    # small shapes consistent with the module
    N = 8          # nodes
    d_in = 4
    d_model = 32
    q_dim = 32
    n_c = 4
    n_pnode = 16
    nclass = 3
    T = 2

    key = jax.random.PRNGKey(0)
    k = jax.random.split(key, 8)

    x = jax.random.normal(k[0], (N, d_in), dtype=jnp.float32)

    # deterministic ring graph, both directions
    src = jnp.arange(N, dtype=jnp.int32)
    dst = (src + 1) % N
    edge_index = jnp.concatenate(
        [jnp.stack([src, dst]), jnp.stack([dst, src])], axis=1
    )  # (2, 16)

    params = {
        "w_nsi": jax.random.normal(k[1], (d_in, q_dim), jnp.float32) * 0.1,
        "b_nsi": jax.random.normal(k[2], (1, q_dim), jnp.float32) * 0.1,
        "w_ff": jax.random.normal(k[3], (d_in, d_model), jnp.float32) * 0.1,
        "b_ff": jax.random.normal(k[4], (1, d_model), jnp.float32) * 0.1,
        "pnode_state": jax.random.normal(k[5], (1, n_pnode, q_dim), jnp.float32),
        "class_neuron": jax.random.normal(k[6], (n_c, nclass, q_dim), jnp.float32),
    }

    # one-time preprocessing (graph + parameter-only), outside the jitted forward
    adjT, w_cat, b_cat, class_w_pad, class_mask = prepare_inference(
        params, edge_index, N, nclass, T)

    fwd = jax.jit(functools.partial(n2node_forward, nclass=nclass))
    out = fwd(x, adjT, w_cat, b_cat, class_w_pad, class_mask)
    out = jax.block_until_ready(out)

    assert out.shape == (N, nclass)
    # rows of log_softmax must (approximately) exponentiate-sum to 1
    assert jnp.allclose(jnp.sum(jnp.exp(out), axis=-1), 1.0, atol=1e-4)

    print("KERNEL_OK")
</pallas_src>

<mosaic_0001>
module attributes {stable_mosaic.version = 11 : i64} {
  func.func @_n2node_kernel(%arg0: i32, %arg1: memref<8x4xf32, #tpu.memory_space<vmem>>, %arg2: memref<8x8xbf16, #tpu.memory_space<vmem>>, %arg3: memref<4x64xf32, #tpu.memory_space<vmem>>, %arg4: memref<1x64xf32, #tpu.memory_space<vmem>>, %arg5: memref<32x128xf32, #tpu.memory_space<vmem>>, %arg6: memref<1x128xf32, #tpu.memory_space<vmem>>, %arg7: memref<8x128xf32, #tpu.memory_space<vmem>>) attributes {dimension_semantics = [#tpu.dimension_semantics<parallel>], iteration_bounds = array<i64: 1>, scalar_prefetch = 0 : i64, scratch_operands = 0 : i64, tpu.core_type = #tpu.core_type<tc>, window_params = [{pipeline_mode = #tpu.pipeline_mode<synchronous>, transform_indices = @transform_0, window_bounds = array<i64: 8, 4>}, {transform_indices = @transform_1, window_bounds = array<i64: 8, 8>}, {pipeline_mode = #tpu.pipeline_mode<synchronous>, transform_indices = @transform_2, window_bounds = array<i64: 4, 64>}, {pipeline_mode = #tpu.pipeline_mode<synchronous>, transform_indices = @transform_3, window_bounds = array<i64: 1, 64>}, {pipeline_mode = #tpu.pipeline_mode<synchronous>, transform_indices = @transform_4, window_bounds = array<i64: 32, 128>}, {pipeline_mode = #tpu.pipeline_mode<synchronous>, transform_indices = @transform_5, window_bounds = array<i64: 1, 128>}, {transform_indices = @transform_6, window_bounds = array<i64: 8, 128>}]} {
    %c0 = arith.constant 0 : index
    %c0_0 = arith.constant 0 : index
    %0 = vector.load %arg1[%c0, %c0_0] : memref<8x4xf32, #tpu.memory_space<vmem>>, vector<8x4xf32>
    %c0_1 = arith.constant 0 : index
    %c0_2 = arith.constant 0 : index
    %1 = vector.load %arg3[%c0_1, %c0_2] : memref<4x64xf32, #tpu.memory_space<vmem>>, vector<4x64xf32>
    %cst = arith.constant dense<0.000000e+00> : vector<8x64xf32>
    %2 = tpu.matmul %0, %1, %cst {dimension_numbers = #tpu.dot_dimension_numbers<[1], [0], [0], [1], [0, 0, 1, 1], [], []>} : vector<8x4xf32>, vector<4x64xf32>, vector<8x64xf32> -> vector<8x64xf32>
    %c0_3 = arith.constant 0 : index
    %c0_4 = arith.constant 0 : index
    %3 = vector.load %arg4[%c0_3, %c0_4] : memref<1x64xf32, #tpu.memory_space<vmem>>, vector<1x64xf32>
    %4 = vector.broadcast %3 : vector<1x64xf32> to vector<8x64xf32>
    %5 = arith.addf %2, %4 : vector<8x64xf32>
    %cst_5 = arith.constant 0.000000e+00 : f32
    %6 = vector.broadcast %cst_5 : f32 to vector<8x64xf32>
    %7 = arith.cmpf ogt, %5, %6 : vector<8x64xf32>
    %cst_6 = arith.constant 0.00999999977 : f32
    %8 = vector.broadcast %cst_6 : f32 to vector<8x64xf32>
    %9 = arith.mulf %8, %5 : vector<8x64xf32>
    %10 = arith.select %7, %5, %9 : vector<8x64xi1>, vector<8x64xf32>
    %11 = vector.extract_strided_slice %10 {offsets = [0, 0], sizes = [8, 32], strides = [1, 1]} : vector<8x64xf32> to vector<8x32xf32>
    %c0_7 = arith.constant 0 : index
    %c0_8 = arith.constant 0 : index
    %12 = vector.load %arg2[%c0_7, %c0_8] : memref<8x8xbf16, #tpu.memory_space<vmem>>, vector<8x8xbf16>
    %13 = arith.truncf %11 : vector<8x32xf32> to vector<8x32xbf16>
    %cst_9 = arith.constant dense<0.000000e+00> : vector<8x32xf32>
    %14 = tpu.matmul %12, %13, %cst_9 {dimension_numbers = #tpu.dot_dimension_numbers<[1], [0], [0], [1], [0, 0, 1, 1], [], []>} : vector<8x8xbf16>, vector<8x32xbf16>, vector<8x32xf32> -> vector<8x32xf32>
    %c0_10 = arith.constant 0 : index
    %c0_11 = arith.constant 0 : index
    %15 = vector.load %arg5[%c0_10, %c0_11] : memref<32x128xf32, #tpu.memory_space<vmem>>, vector<32x128xf32>
    %cst_12 = arith.constant dense<0.000000e+00> : vector<8x128xf32>
    %16 = tpu.matmul %14, %15, %cst_12 {dimension_numbers = #tpu.dot_dimension_numbers<[1], [0], [0], [1], [0, 0, 1, 1], [], []>} : vector<8x32xf32>, vector<32x128xf32>, vector<8x128xf32> -> vector<8x128xf32>
    %c0_13 = arith.constant 0 : index
    %c0_14 = arith.constant 0 : index
    %17 = vector.load %arg6[%c0_13, %c0_14] : memref<1x128xf32, #tpu.memory_space<vmem>>, vector<1x128xf32>
    %18 = vector.broadcast %17 : vector<1x128xf32> to vector<8x128xf32>
    %19 = arith.addf %16, %18 : vector<8x128xf32>
    %cst_15 = arith.constant dense<0xFF800000> : vector<8xf32>
    %20 = vector.multi_reduction <maximumf>, %19, %cst_15 [1] : vector<8x128xf32> to vector<8xf32>
    %21 = vector.shape_cast %20 : vector<8xf32> to vector<8x1xf32>
    %22 = vector.broadcast %21 : vector<8x1xf32> to vector<8x128xf32>
    %23 = arith.subf %19, %22 : vector<8x128xf32>
    %24 = math.exp %23 : vector<8x128xf32>
    %cst_16 = arith.constant dense<0.000000e+00> : vector<8xf32>
    %25 = vector.multi_reduction <add>, %24, %cst_16 [1] : vector<8x128xf32> to vector<8xf32>
    %26 = vector.shape_cast %25 : vector<8xf32> to vector<8x1xf32>
    %27 = math.log %26 : vector<8x1xf32>
    %28 = arith.addf %21, %27 : vector<8x1xf32>
    %29 = vector.broadcast %28 : vector<8x1xf32> to vector<8x128xf32>
    %30 = arith.subf %19, %29 : vector<8x128xf32>
    %c0_17 = arith.constant 0 : index
    %c0_18 = arith.constant 0 : index
    %31 = vector.load %arg7[%c0_17, %c0_18] : memref<8x128xf32, #tpu.memory_space<vmem>>, vector<8x128xf32>
    tpu.vector_store %arg7[%c0_17, %c0_18], %30 {strides = array<i32>} : memref<8x128xf32, #tpu.memory_space<vmem>>, vector<8x128xf32>,
    return
  }
  func.func @transform_0(%arg0: i32) -> (i32, i32) {
    %c0_i32 = arith.constant 0 : i32
    %c0_i32_0 = arith.constant 0 : i32
    %c0_i32_1 = arith.constant 0 : i32
    return %c0_i32, %c0_i32_0 : i32, i32
  }
  func.func @transform_1(%arg0: i32) -> (i32, i32) {
    %c0_i32 = arith.constant 0 : i32
    %c0_i32_0 = arith.constant 0 : i32
    return %arg0, %c0_i32 : i32, i32
  }
  func.func @transform_2(%arg0: i32) -> (i32, i32) {
    %c0_i32 = arith.constant 0 : i32
    %c0_i32_0 = arith.constant 0 : i32
    %c0_i32_1 = arith.constant 0 : i32
    return %c0_i32, %c0_i32_0 : i32, i32
  }
  func.func @transform_3(%arg0: i32) -> (i32, i32) {
    %c0_i32 = arith.constant 0 : i32
    %c0_i32_0 = arith.constant 0 : i32
    %c0_i32_1 = arith.constant 0 : i32
    return %c0_i32, %c0_i32_0 : i32, i32
  }
  func.func @transform_4(%arg0: i32) -> (i32, i32) {
    %c0_i32 = arith.constant 0 : i32
    %c0_i32_0 = arith.constant 0 : i32
    %c0_i32_1 = arith.constant 0 : i32
    return %c0_i32, %c0_i32_0 : i32, i32
  }
  func.func @transform_5(%arg0: i32) -> (i32, i32) {
    %c0_i32 = arith.constant 0 : i32
    %c0_i32_0 = arith.constant 0 : i32
    %c0_i32_1 = arith.constant 0 : i32
    return %c0_i32, %c0_i32_0 : i32, i32
  }
  func.func @transform_6(%arg0: i32) -> (i32, i32) {
    %c0_i32 = arith.constant 0 : i32
    %c0_i32_0 = arith.constant 0 : i32
    return %arg0, %c0_i32 : i32, i32
  }
}

</mosaic_0001>

<llo_original>
// kernel: n2node_forward.1
$region0: #{n2node_forward.1}
  #allocation0 [shape = 'u32[]', space=smem, size = 0x4, offset = 0x4, fixed_abs, tag = 'smem constant byte address 0x4 - core index']
  #allocation1 [shape = 'u32[144,128]{1,0:T(1,128)}', space=vmem, size = 0x12000, scoped, tag = 'internal scratch']
  %s0 = inlined_call_operand.vmem [shape: f32[8,4], index: 0, kind: input, shape index: {}]
  %s1 = inlined_call_operand.vmem [shape: bf16[8,8], index: 1, kind: input, shape index: {}]
  %s2 = inlined_call_operand.vmem [shape: f32[4,64], index: 2, kind: input, shape index: {}]
  %s3 = inlined_call_operand.vmem [shape: f32[1,64], index: 3, kind: input, shape index: {}]
  %s4 = inlined_call_operand.hbm [shape: f32[32,128], index: 4, kind: input, shape index: {}]
  %s5 = inlined_call_operand.vmem [shape: f32[1,128], index: 5, kind: input, shape index: {}]
  %s6 = inlined_call_operand.vmem [shape: f32[8,128], index: 6, kind: output, shape index: {}]
  %s7 = sld [smem:[#allocation0]]
  $region38: #{n2node_forward.1} parent=0
    _
  %s9 = ssub.s32 1, %s7
  %s10 = scalar_select 0, %s9, %s7
  $region1: #{n2node_forward.1} parent=0
    #allocation2 [shape = 'u8[16384]{0}', space=vmem, size = 0x4000, scoped, tag = 'input window, operand 4, single buffered']
    #allocation3 [shape = 's32[1]{0}', space=sflag, size = 0x4, scoped, tag = 'scoped memory for n2node_forward.1']
    %11 = vsyncpa [#allocation3], 0
    // Predicated region
    $region2: #{n2node_forward.1} parent=1 // pred_check
      _
    $region3: #{n2node_forward.1} parent=1 // pred_check_branch
      %13 = sbr.rel (0) target = $region5
    $region4: #{n2node_forward.1} parent=1 // pred_region
      _
    $region5: #{n2node_forward.1} parent=1 // pred_fallthru
      _
    // Predicated region
    $region6: #{n2node_forward.1} parent=1 // pred_check
      _
    $region7: #{n2node_forward.1} parent=1 // pred_check_branch
      %15 = sbr.rel (0) target = $region9
    $region8: #{n2node_forward.1} parent=1 // pred_region
      _
    $region9: #{n2node_forward.1} parent=1 // pred_fallthru
      _
    // Predicated region
    $region10: #{n2node_forward.1} parent=1 // pred_check
      _
    $region11: #{n2node_forward.1} parent=1 // pred_check_branch
      %17 = sbr.rel (0) target = $region13
    $region12: #{n2node_forward.1} parent=1 // pred_region
      _
    $region13: #{n2node_forward.1} parent=1 // pred_fallthru
      _
    // Predicated region
    $region14: #{n2node_forward.1} parent=1 // pred_check
      _
    $region15: #{n2node_forward.1} parent=1 // pred_check_branch
      %19 = sbr.rel (0) target = $region17
    $region16: #{n2node_forward.1} parent=1 // pred_region
      _
    $region17: #{n2node_forward.1} parent=1 // pred_fallthru
      _
    // Predicated region
    $region18: #{n2node_forward.1} parent=1 // pred_check
      _
    $region19: #{n2node_forward.1} parent=1 // pred_check_branch
      %21 = sbr.rel (0) target = $region21
    $region20: #{n2node_forward.1} parent=1 // pred_region
      %s23 = ssub.s32 512, 512
      %24 = vsyncadd [#allocation3], %s23
      %s25 = sshll.u32 [#allocation2], 4
      %s26 = int_to_ptr.vmem [resolvable:$true] %s25
      %31 = dma.hbm_to_vmem [thread:$0]  %s4, 512, %s26, [#allocation3], 128, 128, 8
    $region21: #{n2node_forward.1} parent=1 // pred_fallthru
      _
    // Predicated region
    $region22: #{n2node_forward.1} parent=1 // pred_check
      _
    $region23: #{n2node_forward.1} parent=1 // pred_check_branch
      %33 = sbr.rel (0) target = $region25
    $region24: #{n2node_forward.1} parent=1 // pred_region
      _
    $region25: #{n2node_forward.1} parent=1 // pred_fallthru
      _
    // Predicated region
    $region26: #{n2node_forward.1} parent=1 // pred_check
      _
    $region27: #{n2node_forward.1} parent=1 // pred_check_branch
      %35 = sbr.rel (0) target = $region29
    $region28: #{n2node_forward.1} parent=1 // pred_region
      %36 = dma.done [#allocation3], 512
    $region29: #{n2node_forward.1} parent=1 // pred_fallthru
      _
    %v38 = vld [vmem:[%s0] sm:$0xff]
    %v39 = vld [vmem:[%s2] sm:$0xf]
    %v40 = vld [vmem:[%s3] sm:$0x1]
    %v42 = vlaneseq
    %v43 = vshrl.u32 %v42, 7
    %v44 = vsub.s32 0, %v43
    %v45 = vrot.slane %v40, %v44
    %vm47 = vcmask 31744
    %v49 = vsel %vm47, %v38, 0
    %vm51 = vcmask 1043456
    %v53 = vsel %vm51, %v39, 0
    %55 = vmatprep.subr.mxu0 0.0
    %56 = vmatpush1.msra.mxu0 0.0
    %57 = vmatprep.subr.mxu0 0.0
    %58 = vmatpush1.msra.mxu0 0.0
    %59 = vmatprep.subr.mxu0 0.0
    %60 = vmatpush1.msra.mxu0 0.0
    %61 = vmatprep.subr.mxu0 0.0
    %62 = vmatpush1.msra.mxu0 0.0
    %63 = vmatprep.subr.mxu0 0.0
    %64 = vmatpush1.msra.mxu0 0.0
    %65 = vmatprep.subr.mxu0 0.0
    %66 = vmatpush1.msra.mxu0 0.0
    %67 = vmatprep.subr.mxu0 0.0
    %68 = vmatpush1.msra.mxu0 0.0
    %69 = vmatprep.subr.mxu0 0.0
    %70 = vmatpush1.msra.mxu0 0.0
    %71 = vmatprep.subr.mxu0 0.0
    %72 = vmatpush1.msra.mxu0 0.0
    %73 = vmatprep.subr.mxu0 0.0
    %74 = vmatpush1.msra.mxu0 0.0
    %75 = vmatprep.subr.mxu0 0.0
    %76 = vmatpush1.msra.mxu0 0.0
    %77 = vmatprep.subr.mxu0 0.0
    %78 = vmatpush1.msra.mxu0 0.0
    %79 = vmatprep.subr.mxu0 0.0
    %80 = vmatpush1.msra.mxu0 0.0
    %81 = vmatprep.subr.mxu0 0.0
    %82 = vmatpush1.msra.mxu0 0.0
    %83 = vmatprep.subr.mxu0 0.0
    %84 = vmatpush1.msra.mxu0 0.0
    %85 = vmatprep.subr.mxu0 0.0
    %86 = vmatpush1.msra.mxu0 %v53
    %87 = vmatprep.subr.mxu0 0.0
    %88 = vmatpush2.msra.mxu0 0.0
    %89 = vmatprep.subr.mxu0 0.0
    %90 = vmatpush2.msra.mxu0 0.0
    %91 = vmatprep.subr.mxu0 0.0
    %92 = vmatpush2.msra.mxu0 0.0
    %93 = vmatprep.subr.mxu0 0.0
    %94 = vmatpush2.msra.mxu0 0.0
    %95 = vmatprep.subr.mxu0 0.0
    %96 = vmatpush2.msra.mxu0 0.0
    %97 = vmatprep.subr.mxu0 0.0
    %98 = vmatpush2.msra.mxu0 0.0
    %99 = vmatprep.subr.mxu0 0.0
    %100 = vmatpush2.msra.mxu0 0.0
    %101 = vmatprep.subr.mxu0 0.0
    %102 = vmatpush2.msra.mxu0 0.0
    %103 = vmatprep.subr.mxu0 0.0
    %104 = vmatpush2.msra.mxu0 0.0
    %105 = vmatprep.subr.mxu0 0.0
    %106 = vmatpush2.msra.mxu0 0.0
    %107 = vmatprep.subr.mxu0 0.0
    %108 = vmatpush2.msra.mxu0 0.0
    %109 = vmatprep.subr.mxu0 0.0
    %110 = vmatpush2.msra.mxu0 0.0
    %111 = vmatprep.subr.mxu0 0.0
    %112 = vmatpush2.msra.mxu0 0.0
    %113 = vmatprep.subr.mxu0 0.0
    %114 = vmatpush2.msra.mxu0 0.0
    %115 = vmatprep.subr.mxu0 0.0
    %116 = vmatpush2.msra.mxu0 0.0
    %117 = vmatprep.subr.mxu0 0.0
    %118 = vmatpush2.msra.mxu0 0.0
    %119 = vmatprep.mubr.f32.mxu0 0.0
    %120 = vmatmul.mubr.f32.gmra.mxu0 %v49
    %v121 = vpop.f32.mrf.mxu0
    %v122 = vadd.f32 %v45, %v121
    %v123 = vpop.f32.mrf.mxu0
    %124 = vdwg.mxu0
    %vm125 = vcmp.gt.f32.partialorder %v122, 0.0
    %v126 = vmul.f32 %v122, 0.01
    %v127 = vsel %vm125, %v122, %v126
    %v128 = vld [vmem:[%s1] sm:$0xf]
    %v129 = vpack.c.bf16 %v127, %v127
    %vm130 = vcmask 64512
    %v132 = vsel %vm130, %v128, 0
    %v135 = vsel %vm51, %v129, 0
    %137 = vmatprep.subr.bf16.mxu0 0
    %138 = vmatpush1.bf16.msra.mxu0 0
    %139 = vmatprep.subr.bf16.mxu0 0
    %140 = vmatpush1.bf16.msra.mxu0 0
    %141 = vmatprep.subr.bf16.mxu0 0
    %142 = vmatpush1.bf16.msra.mxu0 0
    %143 = vmatprep.subr.bf16.mxu0 0
    %144 = vmatpush1.bf16.msra.mxu0 0
    %145 = vmatprep.subr.bf16.mxu0 0
    %146 = vmatpush1.bf16.msra.mxu0 0
    %147 = vmatprep.subr.bf16.mxu0 0
    %148 = vmatpush1.bf16.msra.mxu0 0
    %149 = vmatprep.subr.bf16.mxu0 0
    %150 = vmatpush1.bf16.msra.mxu0 0
    %151 = vmatprep.subr.bf16.mxu0 0
    %152 = vmatpush1.bf16.msra.mxu0 %v135
    %153 = vmatprep.subr.bf16.mxu0 0
    %154 = vmatpush2.bf16.msra.mxu0 0
    %155 = vmatprep.subr.bf16.mxu0 0
    %156 = vmatpush2.bf16.msra.mxu0 0
    %157 = vmatprep.subr.bf16.mxu0 0
    %158 = vmatpush2.bf16.msra.mxu0 0
    %159 = vmatprep.subr.bf16.mxu0 0
    %160 = vmatpush2.bf16.msra.mxu0 0
    %161 = vmatprep.subr.bf16.mxu0 0
    %162 = vmatpush2.bf16.msra.mxu0 0
    %163 = vmatprep.subr.bf16.mxu0 0
    %164 = vmatpush2.bf16.msra.mxu0 0
    %165 = vmatprep.subr.bf16.mxu0 0
    %166 = vmatpush2.bf16.msra.mxu0 0
    %167 = vmatprep.subr.bf16.mxu0 0
    %168 = vmatpush2.bf16.msra.mxu0 0
    %169 = vmatprep.mubr.bf16.mxu0 0
    %170 = vmatmul.mubr.bf16.gmra.mxu0 %v132
    %v171 = vpop.f32.mrf.mxu0
    %v172 = vadd.f32 0.0, %v171
    %v173 = vpop.f32.mrf.mxu0
    %v174 = vpop.f32.mrf.mxu0
    %v175 = vpop.f32.mrf.mxu0
    %176 = vdwg.mxu0
    %v177 = vld [vmem:[#allocation2] sm:$0xff]
    %v178 = vld [vmem:[#allocation2 + $0x8] sm:$0xff]
    %v179 = vld [vmem:[#allocation2 + $0x10] sm:$0xff]
    %v180 = vld [vmem:[#allocation2 + $0x18] sm:$0xff]
    %v181 = vld [vmem:[%s5] sm:$0x1]
    %v183 = vlaneseq
    %v184 = vshrl.u32 %v183, 7
    %v185 = vsub.s32 0, %v184
    %v186 = vrot.slane %v181, %v185
    %vm188 = vcmask 261120
    %v190 = vsel %vm188, %v172, 0
    %192 = vmatprep.subr.mxu0 0.0
    %193 = vmatpush1.msra.mxu0 0.0
    %194 = vmatprep.subr.mxu0 0.0
    %195 = vmatpush1.msra.mxu0 0.0
    %196 = vmatprep.subr.mxu0 0.0
    %197 = vmatpush1.msra.mxu0 0.0
    %198 = vmatprep.subr.mxu0 0.0
    %199 = vmatpush1.msra.mxu0 0.0
    %200 = vmatprep.subr.mxu0 0.0
    %201 = vmatpush1.msra.mxu0 0.0
    %202 = vmatprep.subr.mxu0 0.0
    %203 = vmatpush1.msra.mxu0 0.0
    %204 = vmatprep.subr.mxu0 0.0
    %205 = vmatpush1.msra.mxu0 0.0
    %206 = vmatprep.subr.mxu0 0.0
    %207 = vmatpush1.msra.mxu0 0.0
    %208 = vmatprep.subr.mxu0 0.0
    %209 = vmatpush1.msra.mxu0 0.0
    %210 = vmatprep.subr.mxu0 0.0
    %211 = vmatpush1.msra.mxu0 0.0
    %212 = vmatprep.subr.mxu0 0.0
    %213 = vmatpush1.msra.mxu0 0.0
    %214 = vmatprep.subr.mxu0 0.0
    %215 = vmatpush1.msra.mxu0 0.0
    %216 = vmatprep.subr.mxu0 0.0
    %217 = vmatpush1.msra.mxu0 %v180
    %218 = vmatprep.subr.mxu0 0.0
    %219 = vmatpush1.msra.mxu0 %v179
    %220 = vmatprep.subr.mxu0 0.0
    %221 = vmatpush1.msra.mxu0 %v178
    %222 = vmatprep.subr.mxu0 0.0
    %223 = vmatpush1.msra.mxu0 %v177
    %224 = vmatprep.subr.mxu0 0.0
    %225 = vmatpush2.msra.mxu0 0.0
    %226 = vmatprep.subr.mxu0 0.0
    %227 = vmatpush2.msra.mxu0 0.0
    %228 = vmatprep.subr.mxu0 0.0
    %229 = vmatpush2.msra.mxu0 0.0
    %230 = vmatprep.subr.mxu0 0.0
    %231 = vmatpush2.msra.mxu0 0.0
    %232 = vmatprep.subr.mxu0 0.0
    %233 = vmatpush2.msra.mxu0 0.0
    %234 = vmatprep.subr.mxu0 0.0
    %235 = vmatpush2.msra.mxu0 0.0
    %236 = vmatprep.subr.mxu0 0.0
    %237 = vmatpush2.msra.mxu0 0.0
    %238 = vmatprep.subr.mxu0 0.0
    %239 = vmatpush2.msra.mxu0 0.0
    %240 = vmatprep.subr.mxu0 0.0
    %241 = vmatpush2.msra.mxu0 0.0
    %242 = vmatprep.subr.mxu0 0.0
    %243 = vmatpush2.msra.mxu0 0.0
    %244 = vmatprep.subr.mxu0 0.0
    %245 = vmatpush2.msra.mxu0 0.0
    %246 = vmatprep.subr.mxu0 0.0
    %247 = vmatpush2.msra.mxu0 0.0
    %248 = vmatprep.subr.mxu0 0.0
    %249 = vmatpush2.msra.mxu0 0.0
    %250 = vmatprep.subr.mxu0 0.0
    %251 = vmatpush2.msra.mxu0 0.0
    %252 = vmatprep.subr.mxu0 0.0
    %253 = vmatpush2.msra.mxu0 0.0
    %254 = vmatprep.subr.mxu0 0.0
    %255 = vmatpush2.msra.mxu0 0.0
    %256 = vmatprep.mubr.f32.mxu0 0.0
    %257 = vmatmul.mubr.f32.gmra.mxu0 %v190
    %v258 = vpop.f32.mrf.mxu0
    %v259 = vadd.f32 %v186, %v258
    %v260 = vpop.f32.mrf.mxu0
    %261 = vdwg.mxu0
    %262 = vmax.xlane.f32.xlu0 %v259
    %v263 = vpop.xlane.xlu0 %262
    %v264 = vsub.f32 %v259, %v263
    %v265 = vmul.f32 %v264, 1.442695
    %v266 = vpow.pop %v265
    %267 = vadd.xlane.f32.xlu0 %v266
    %v268 = vpop.xlane.xlu0 %267
    %v269 = vlog2.pop %v268
    %v270 = vmul.f32 %v269, 0.6931472
    %v271 = vadd.f32 %v263, %v270
    %v272 = vsub.f32 %v259, %v271
    %273 = vst [vmem:[%s6] sm:$0xff] %v272
    // Predicated region
    $region30: #{n2node_forward.1} parent=1 // pred_check
      _
    $region31: #{n2node_forward.1} parent=1 // pred_check_branch
      %275 = sbr.rel (0) target = $region33
    $region32: #{n2node_forward.1} parent=1 // pred_region
      _
    $region33: #{n2node_forward.1} parent=1 // pred_fallthru
      _
    // Predicated region
    $region34: #{n2node_forward.1} parent=1 // pred_check
      _
    $region35: #{n2node_forward.1} parent=1 // pred_check_branch
      %277 = sbr.rel (0) target = $region37
    $region36: #{n2node_forward.1} parent=1 // pred_region
      _
    $region37: #{n2node_forward.1} parent=1 // pred_fallthru
      _
    %278 = vsyncpa [#allocation3], 1

</llo_original>
